<compile_context>
chip_gen: v7x
topology: tpu7x:2x2x1
jax: 0.10.0
libtpu: 0.0.40
codegen_flags: <defaults>
</compile_context>

<pallas_src>
import functools

import jax
import jax.numpy as jnp
from jax.experimental import pallas as pl
from jax.experimental.pallas import tpu as pltpu


_LANE = 128     # last-dim tiling granularity (vreg lanes)
_SUBLANE = 8    # second-to-last-dim granularity (f32 sublanes)


def _round_up(x, m):
    return (x + m - 1) // m * m


def _mlp_kernel(*refs, n_layers):
    """Fused MLP: x -> [Linear, Sigmoid] * (L-1) -> Linear.

    refs = (x_ref, w0_ref, b0_ref, ..., w_{L-1}_ref, b_{L-1}_ref, o_ref)
      x_ref : (tm, K0p)     input batch tile (f32, zero-padded K)
      w_ref : (Kp_i, Np_i)  pre-transposed, zero-padded weight (f32)
      b_ref : (1, Np_i)     zero-padded bias (f32)
      o_ref : (tm, NLp)     output batch tile
    Inter-layer activations stay on-chip; they never touch HBM.
    """
    x_ref = refs[0]
    o_ref = refs[-1]
    h = x_ref[...].astype(jnp.float32)
    for i in range(n_layers):
        w = refs[1 + 2 * i][...]
        b = refs[2 + 2 * i][...]
        # MXU matmul with f32 accumulation; bias add on the VPU.
        h = jnp.dot(h, w, preferred_element_type=jnp.float32) + b
        if i < n_layers - 1:
            # Sigmoid between layers (exp runs on the EUP).
            h = 1.0 / (1.0 + jnp.exp(-h))
    o_ref[...] = h.astype(o_ref.dtype)


@functools.partial(jax.jit, static_argnames=("out_features",))
def _mlp_forward(x, padded_params, out_features):
    """Pad x, run the fused kernel over batch tiles, slice the result back."""
    M, K = x.shape
    K0p = padded_params[0][0].shape[0]
    NLp = padded_params[-1][0].shape[1]

    # Batch tiling: rows go on the (parallel) grid axis.
    M8 = _round_up(M, _SUBLANE)
    tm = min(256, M8)                 # modest tile: fits 64 MiB VMEM on v7x too
    M_pad = _round_up(M8, tm)

    x_pad = jnp.zeros((M_pad, K0p), x.dtype).at[:M, :K].set(x)

    n_layers = len(padded_params)
    in_specs = [pl.BlockSpec((tm, K0p), lambda i: (i, 0))]
    flat_inputs = [x_pad]
    for wt, b in padded_params:
        Kp, Np = wt.shape
        # Whole-array blocks with grid-invariant index_map -> weights and
        # biases stay resident in VMEM across all batch tiles.
        in_specs.append(pl.BlockSpec((Kp, Np), lambda i: (0, 0)))
        in_specs.append(pl.BlockSpec((1, Np), lambda i: (0, 0)))
        flat_inputs += [wt, b]

    out = pl.pallas_call(
        functools.partial(_mlp_kernel, n_layers=n_layers),
        out_shape=jax.ShapeDtypeStruct((M_pad, NLp), x.dtype),
        grid=(M_pad // tm,),
        in_specs=in_specs,
        out_specs=pl.BlockSpec((tm, NLp), lambda i: (i, 0)),
        compiler_params=pltpu.CompilerParams(
            dimension_semantics=("parallel",)),
    )(*flat_inputs)

    return out[:M, :out_features]


class MLPPallas:
    """Pallas port of the PyTorch MLP module (Sigmoid activation)."""

    def __init__(self, in_features, layer_features, key):
        self._in_features = in_features
        self._layer_features = tuple(layer_features)
        features_list = [in_features] + list(layer_features)

        self.params = []          # PyTorch-layout (out, in) weight, (out,) bias
        padded = []               # pre-transposed (K_pad, N_pad) + (1, N_pad)
        for i in range(len(features_list) - 1):
            fan_in = features_list[i]
            fan_out = features_list[i + 1]
            key, wk, bk = jax.random.split(key, 3)
            # Deterministic init mimicking torch.nn.Linear default:
            # U(-1/sqrt(fan_in), 1/sqrt(fan_in)) for both weight and bias.
            bound = 1.0 / (fan_in ** 0.5)
            w = jax.random.uniform(
                wk, (fan_out, fan_in), jnp.float32, -bound, bound)
            b = jax.random.uniform(
                bk, (fan_out,), jnp.float32, -bound, bound)
            self.params.append((w, b))

            # One-time layout prep: transpose + zero-pad to lane-dense tiles.
            Kp = _round_up(fan_in, _LANE)
            Np = _round_up(fan_out, _LANE)
            wt_pad = jnp.zeros((Kp, Np), jnp.float32)
            wt_pad = wt_pad.at[:fan_in, :fan_out].set(w.T)
            b_pad = jnp.zeros((1, Np), jnp.float32)
            b_pad = b_pad.at[0, :fan_out].set(b)
            padded.append((wt_pad, b_pad))
        self.padded_params = tuple(padded)

    def __call__(self, x):
        return _mlp_forward(x, self.padded_params, self.out_features)

    @property
    def in_features(self):
        return self._in_features

    @property
    def layer_features(self):
        return self._layer_features

    @property
    def out_features(self):
        return self._layer_features[-1]


def _reference_forward(x, params):
    """Pure-JAX reference with identical semantics (for a sanity check)."""
    n = len(params)
    for i, (w, b) in enumerate(params):
        x = x @ w.T + b
        if i < n - 1:
            x = jax.nn.sigmoid(x)
    return x


if __name__ == "__main__":
    key = jax.random.PRNGKey(0)
    key, xk, mk = jax.random.split(key, 3)

    batch = 8
    in_features = 16
    layer_features = (32, 64, 8)

    x = jax.random.normal(xk, (batch, in_features), dtype=jnp.float32)

    model = MLPPallas(in_features, layer_features, mk)
    out = model(x)
    out = jax.block_until_ready(out)

    ref = _reference_forward(x, model.params)
    assert out.shape == (batch, layer_features[-1]), out.shape
    assert jnp.allclose(out, ref, atol=1e-5, rtol=1e-5), "mismatch vs reference"

    print("KERNEL_OK")
</pallas_src>

<mosaic_0001>
module attributes {stable_mosaic.version = 11 : i64} {
  func.func @_mlp_kernel(%arg0: i32, %arg1: memref<8x128xf32, #tpu.memory_space<vmem>>, %arg2: memref<128x128xf32, #tpu.memory_space<vmem>>, %arg3: memref<1x128xf32, #tpu.memory_space<vmem>>, %arg4: memref<128x128xf32, #tpu.memory_space<vmem>>, %arg5: memref<1x128xf32, #tpu.memory_space<vmem>>, %arg6: memref<128x128xf32, #tpu.memory_space<vmem>>, %arg7: memref<1x128xf32, #tpu.memory_space<vmem>>, %arg8: memref<8x128xf32, #tpu.memory_space<vmem>>) attributes {dimension_semantics = [#tpu.dimension_semantics<parallel>], iteration_bounds = array<i64: 1>, scalar_prefetch = 0 : i64, scratch_operands = 0 : i64, tpu.core_type = #tpu.core_type<tc>, window_params = [{transform_indices = @transform_0, window_bounds = array<i64: 8, 128>}, {pipeline_mode = #tpu.pipeline_mode<synchronous>, transform_indices = @transform_1, window_bounds = array<i64: 128, 128>}, {pipeline_mode = #tpu.pipeline_mode<synchronous>, transform_indices = @transform_2, window_bounds = array<i64: 1, 128>}, {pipeline_mode = #tpu.pipeline_mode<synchronous>, transform_indices = @transform_3, window_bounds = array<i64: 128, 128>}, {pipeline_mode = #tpu.pipeline_mode<synchronous>, transform_indices = @transform_4, window_bounds = array<i64: 1, 128>}, {pipeline_mode = #tpu.pipeline_mode<synchronous>, transform_indices = @transform_5, window_bounds = array<i64: 128, 128>}, {pipeline_mode = #tpu.pipeline_mode<synchronous>, transform_indices = @transform_6, window_bounds = array<i64: 1, 128>}, {transform_indices = @transform_7, window_bounds = array<i64: 8, 128>}]} {
    %c0 = arith.constant 0 : index
    %c0_0 = arith.constant 0 : index
    %0 = vector.load %arg1[%c0, %c0_0] : memref<8x128xf32, #tpu.memory_space<vmem>>, vector<8x128xf32>
    %c0_1 = arith.constant 0 : index
    %c0_2 = arith.constant 0 : index
    %1 = vector.load %arg2[%c0_1, %c0_2] : memref<128x128xf32, #tpu.memory_space<vmem>>, vector<128x128xf32>
    %c0_3 = arith.constant 0 : index
    %c0_4 = arith.constant 0 : index
    %2 = vector.load %arg3[%c0_3, %c0_4] : memref<1x128xf32, #tpu.memory_space<vmem>>, vector<1x128xf32>
    %cst = arith.constant dense<0.000000e+00> : vector<8x128xf32>
    %3 = tpu.matmul %0, %1, %cst {dimension_numbers = #tpu.dot_dimension_numbers<[1], [0], [0], [1], [0, 0, 1, 1], [], []>} : vector<8x128xf32>, vector<128x128xf32>, vector<8x128xf32> -> vector<8x128xf32>
    %4 = vector.broadcast %2 : vector<1x128xf32> to vector<8x128xf32>
    %5 = arith.addf %3, %4 : vector<8x128xf32>
    %cst_5 = arith.constant 0.000000e+00 : f32
    %6 = vector.broadcast %cst_5 : f32 to vector<8x128xf32>
    %7 = arith.subf %6, %5 : vector<8x128xf32>
    %8 = math.exp %7 : vector<8x128xf32>
    %cst_6 = arith.constant 1.000000e+00 : f32
    %9 = vector.broadcast %cst_6 : f32 to vector<8x128xf32>
    %10 = arith.addf %9, %8 : vector<8x128xf32>
    %cst_7 = arith.constant 1.000000e+00 : f32
    %11 = vector.broadcast %cst_7 : f32 to vector<8x128xf32>
    %12 = arith.divf %11, %10 : vector<8x128xf32>
    %c0_8 = arith.constant 0 : index
    %c0_9 = arith.constant 0 : index
    %13 = vector.load %arg4[%c0_8, %c0_9] : memref<128x128xf32, #tpu.memory_space<vmem>>, vector<128x128xf32>
    %c0_10 = arith.constant 0 : index
    %c0_11 = arith.constant 0 : index
    %14 = vector.load %arg5[%c0_10, %c0_11] : memref<1x128xf32, #tpu.memory_space<vmem>>, vector<1x128xf32>
    %cst_12 = arith.constant dense<0.000000e+00> : vector<8x128xf32>
    %15 = tpu.matmul %12, %13, %cst_12 {dimension_numbers = #tpu.dot_dimension_numbers<[1], [0], [0], [1], [0, 0, 1, 1], [], []>} : vector<8x128xf32>, vector<128x128xf32>, vector<8x128xf32> -> vector<8x128xf32>
    %16 = vector.broadcast %14 : vector<1x128xf32> to vector<8x128xf32>
    %17 = arith.addf %15, %16 : vector<8x128xf32>
    %cst_13 = arith.constant 0.000000e+00 : f32
    %18 = vector.broadcast %cst_13 : f32 to vector<8x128xf32>
    %19 = arith.subf %18, %17 : vector<8x128xf32>
    %20 = math.exp %19 : vector<8x128xf32>
    %cst_14 = arith.constant 1.000000e+00 : f32
    %21 = vector.broadcast %cst_14 : f32 to vector<8x128xf32>
    %22 = arith.addf %21, %20 : vector<8x128xf32>
    %cst_15 = arith.constant 1.000000e+00 : f32
    %23 = vector.broadcast %cst_15 : f32 to vector<8x128xf32>
    %24 = arith.divf %23, %22 : vector<8x128xf32>
    %c0_16 = arith.constant 0 : index
    %c0_17 = arith.constant 0 : index
    %25 = vector.load %arg6[%c0_16, %c0_17] : memref<128x128xf32, #tpu.memory_space<vmem>>, vector<128x128xf32>
    %c0_18 = arith.constant 0 : index
    %c0_19 = arith.constant 0 : index
    %26 = vector.load %arg7[%c0_18, %c0_19] : memref<1x128xf32, #tpu.memory_space<vmem>>, vector<1x128xf32>
    %cst_20 = arith.constant dense<0.000000e+00> : vector<8x128xf32>
    %27 = tpu.matmul %24, %25, %cst_20 {dimension_numbers = #tpu.dot_dimension_numbers<[1], [0], [0], [1], [0, 0, 1, 1], [], []>} : vector<8x128xf32>, vector<128x128xf32>, vector<8x128xf32> -> vector<8x128xf32>
    %28 = vector.broadcast %26 : vector<1x128xf32> to vector<8x128xf32>
    %29 = arith.addf %27, %28 : vector<8x128xf32>
    %c0_21 = arith.constant 0 : index
    %c0_22 = arith.constant 0 : index
    %30 = vector.load %arg8[%c0_21, %c0_22] : memref<8x128xf32, #tpu.memory_space<vmem>>, vector<8x128xf32>
    tpu.vector_store %arg8[%c0_21, %c0_22], %29 {strides = array<i32>} : memref<8x128xf32, #tpu.memory_space<vmem>>, vector<8x128xf32>,
    return
  }
  func.func @transform_0(%arg0: i32) -> (i32, i32) {
    %c0_i32 = arith.constant 0 : i32
    %c0_i32_0 = arith.constant 0 : i32
    return %arg0, %c0_i32 : i32, i32
  }
  func.func @transform_1(%arg0: i32) -> (i32, i32) {
    %c0_i32 = arith.constant 0 : i32
    %c0_i32_0 = arith.constant 0 : i32
    %c0_i32_1 = arith.constant 0 : i32
    return %c0_i32, %c0_i32_0 : i32, i32
  }
  func.func @transform_2(%arg0: i32) -> (i32, i32) {
    %c0_i32 = arith.constant 0 : i32
    %c0_i32_0 = arith.constant 0 : i32
    %c0_i32_1 = arith.constant 0 : i32
    return %c0_i32, %c0_i32_0 : i32, i32
  }
  func.func @transform_3(%arg0: i32) -> (i32, i32) {
    %c0_i32 = arith.constant 0 : i32
    %c0_i32_0 = arith.constant 0 : i32
    %c0_i32_1 = arith.constant 0 : i32
    return %c0_i32, %c0_i32_0 : i32, i32
  }
  func.func @transform_4(%arg0: i32) -> (i32, i32) {
    %c0_i32 = arith.constant 0 : i32
    %c0_i32_0 = arith.constant 0 : i32
    %c0_i32_1 = arith.constant 0 : i32
    return %c0_i32, %c0_i32_0 : i32, i32
  }
  func.func @transform_5(%arg0: i32) -> (i32, i32) {
    %c0_i32 = arith.constant 0 : i32
    %c0_i32_0 = arith.constant 0 : i32
    %c0_i32_1 = arith.constant 0 : i32
    return %c0_i32, %c0_i32_0 : i32, i32
  }
  func.func @transform_6(%arg0: i32) -> (i32, i32) {
    %c0_i32 = arith.constant 0 : i32
    %c0_i32_0 = arith.constant 0 : i32
    %c0_i32_1 = arith.constant 0 : i32
    return %c0_i32, %c0_i32_0 : i32, i32
  }
  func.func @transform_7(%arg0: i32) -> (i32, i32) {
    %c0_i32 = arith.constant 0 : i32
    %c0_i32_0 = arith.constant 0 : i32
    return %arg0, %c0_i32 : i32, i32
  }
}

</mosaic_0001>

<llo_original>
// kernel: _mlp_forward.1
$region0: #{_mlp_forward.1}
  #allocation0 [shape = 'u32[]', space=smem, size = 0x4, offset = 0x4, fixed_abs, tag = 'smem constant byte address 0x4 - core index']
  #allocation1 [shape = 'u32[144,128]{1,0:T(1,128)}', space=vmem, size = 0x12000, scoped, tag = 'internal scratch']
  %s0 = inlined_call_operand.vmem [shape: f32[8,128], index: 0, kind: input, shape index: {}]
  %s1 = inlined_call_operand.hbm [shape: f32[128,128], index: 1, kind: input, shape index: {}]
  %s2 = inlined_call_operand.vmem [shape: f32[1,128], index: 2, kind: input, shape index: {}]
  %s3 = inlined_call_operand.hbm [shape: f32[128,128], index: 3, kind: input, shape index: {}]
  %s4 = inlined_call_operand.vmem [shape: f32[1,128], index: 4, kind: input, shape index: {}]
  %s5 = inlined_call_operand.hbm [shape: f32[128,128], index: 5, kind: input, shape index: {}]
  %s6 = inlined_call_operand.vmem [shape: f32[1,128], index: 6, kind: input, shape index: {}]
  %s7 = inlined_call_operand.hbm [shape: f32[8,128], index: 7, kind: output, shape index: {}]
  %s8 = sld [smem:[#allocation0]]
  $region50: #{_mlp_forward.1} parent=0
    _
  %s10 = ssub.s32 1, %s8
  %s11 = scalar_select 0, %s10, %s8
  $region1: #{_mlp_forward.1} parent=0
    #allocation2 [shape = 'u8[65536]{0}', space=vmem, size = 0x10000, scoped, tag = 'input window, operand 1, single buffered']
    #allocation3 [shape = 's32[1]{0}', space=sflag, size = 0x4, scoped, tag = 'scoped memory for _mlp_forward.1']
    #allocation4 [shape = 's32[1]{0}', space=sflag, size = 0x4, scoped, tag = 'scoped memory for _mlp_forward.1']
    #allocation5 [shape = 'u8[65536]{0}', space=vmem, size = 0x10000, scoped, tag = 'input window, operand 3, single buffered']
    #allocation6 [shape = 's32[1]{0}', space=sflag, size = 0x4, scoped, tag = 'scoped memory for _mlp_forward.1']
    #allocation7 [shape = 'u8[65536]{0}', space=vmem, size = 0x10000, scoped, tag = 'input window, operand 5, single buffered']
    #allocation8 [shape = 'u8[4096]{0}', space=vmem, size = 0x1000, scoped, tag = 'output window, operand 0, single buffered']
    %12 = vsyncpa [#allocation3], 0
    %13 = vsyncpa [#allocation6], 0
    %14 = vsyncpa [#allocation4], 0
    // Predicated region
    $region2: #{_mlp_forward.1} parent=1 // pred_check
      _
    $region3: #{_mlp_forward.1} parent=1 // pred_check_branch
      %16 = sbr.rel (0) target = $region5
    $region4: #{_mlp_forward.1} parent=1 // pred_region
      _
    $region5: #{_mlp_forward.1} parent=1 // pred_fallthru
      _
    // Predicated region
    $region6: #{_mlp_forward.1} parent=1 // pred_check
      _
    $region7: #{_mlp_forward.1} parent=1 // pred_check_branch
      %18 = sbr.rel (0) target = $region9
    $region8: #{_mlp_forward.1} parent=1 // pred_region
      %s20 = ssub.s32 2048, 2048
      %21 = vsyncadd [#allocation3], %s20
      %s22 = sshll.u32 [#allocation2], 4
      %s23 = int_to_ptr.vmem [resolvable:$true] %s22
      %28 = dma.hbm_to_vmem [thread:$0]  %s1, 2048, %s23, [#allocation3], 128, 128, 8
    $region9: #{_mlp_forward.1} parent=1 // pred_fallthru
      _
    // Predicated region
    $region10: #{_mlp_forward.1} parent=1 // pred_check
      _
    $region11: #{_mlp_forward.1} parent=1 // pred_check_branch
      %30 = sbr.rel (0) target = $region13
    $region12: #{_mlp_forward.1} parent=1 // pred_region
      _
    $region13: #{_mlp_forward.1} parent=1 // pred_fallthru
      _
    // Predicated region
    $region14: #{_mlp_forward.1} parent=1 // pred_check
      _
    $region15: #{_mlp_forward.1} parent=1 // pred_check_branch
      %32 = sbr.rel (0) target = $region17
    $region16: #{_mlp_forward.1} parent=1 // pred_region
      %s34 = ssub.s32 2048, 2048
      %35 = vsyncadd [#allocation6], %s34
      %s36 = sshll.u32 [#allocation5], 4
      %s37 = int_to_ptr.vmem [resolvable:$true] %s36
      %42 = dma.hbm_to_vmem [thread:$0]  %s3, 2048, %s37, [#allocation6], 128, 128, 8
    $region17: #{_mlp_forward.1} parent=1 // pred_fallthru
      _
    // Predicated region
    $region18: #{_mlp_forward.1} parent=1 // pred_check
      _
    $region19: #{_mlp_forward.1} parent=1 // pred_check_branch
      %44 = sbr.rel (0) target = $region21
    $region20: #{_mlp_forward.1} parent=1 // pred_region
      _
    $region21: #{_mlp_forward.1} parent=1 // pred_fallthru
      _
    // Predicated region
    $region22: #{_mlp_forward.1} parent=1 // pred_check
      _
    $region23: #{_mlp_forward.1} parent=1 // pred_check_branch
      %46 = sbr.rel (0) target = $region25
    $region24: #{_mlp_forward.1} parent=1 // pred_region
      %s48 = ssub.s32 2048, 2048
      %49 = vsyncadd [#allocation6], %s48
      %s50 = sshll.u32 [#allocation7], 4
      %s51 = int_to_ptr.vmem [resolvable:$true] %s50
      %56 = dma.hbm_to_vmem [thread:$0]  %s5, 2048, %s51, [#allocation6], 128, 128, 8
    $region25: #{_mlp_forward.1} parent=1 // pred_fallthru
      _
    // Predicated region
    $region26: #{_mlp_forward.1} parent=1 // pred_check
      _
    $region27: #{_mlp_forward.1} parent=1 // pred_check_branch
      %58 = sbr.rel (0) target = $region29
    $region28: #{_mlp_forward.1} parent=1 // pred_region
      _
    $region29: #{_mlp_forward.1} parent=1 // pred_fallthru
      _
    // Predicated region
    $region30: #{_mlp_forward.1} parent=1 // pred_check
      _
    $region31: #{_mlp_forward.1} parent=1 // pred_check_branch
      %60 = sbr.rel (0) target = $region33
    $region32: #{_mlp_forward.1} parent=1 // pred_region
      %61 = dma.done [#allocation3], 2048
    $region33: #{_mlp_forward.1} parent=1 // pred_fallthru
      _
    // Predicated region
    $region34: #{_mlp_forward.1} parent=1 // pred_check
      _
    $region35: #{_mlp_forward.1} parent=1 // pred_check_branch
      %63 = sbr.rel (0) target = $region37
    $region36: #{_mlp_forward.1} parent=1 // pred_region
      %64 = dma.done [#allocation6], 2048
    $region37: #{_mlp_forward.1} parent=1 // pred_fallthru
      _
    // Predicated region
    $region38: #{_mlp_forward.1} parent=1 // pred_check
      _
    $region39: #{_mlp_forward.1} parent=1 // pred_check_branch
      %66 = sbr.rel (0) target = $region41
    $region40: #{_mlp_forward.1} parent=1 // pred_region
      %67 = dma.done [#allocation6], 2048
    $region41: #{_mlp_forward.1} parent=1 // pred_fallthru
      _
    %v68 = vld [vmem:[%s0] sm:$0xff]
    %v69 = vld [vmem:[#allocation2] sm:$0xff]
    %v70 = vld [vmem:[#allocation2 + $0x8] sm:$0xff]
    %v71 = vld [vmem:[#allocation2 + $0x10] sm:$0xff]
    %v72 = vld [vmem:[#allocation2 + $0x18] sm:$0xff]
    %v73 = vld [vmem:[#allocation2 + $0x20] sm:$0xff]
    %v74 = vld [vmem:[#allocation2 + $0x28] sm:$0xff]
    %v75 = vld [vmem:[#allocation2 + $0x30] sm:$0xff]
    %v76 = vld [vmem:[#allocation2 + $0x38] sm:$0xff]
    %v77 = vld [vmem:[#allocation2 + $0x40] sm:$0xff]
    %v78 = vld [vmem:[#allocation2 + $0x48] sm:$0xff]
    %v79 = vld [vmem:[#allocation2 + $0x50] sm:$0xff]
    %v80 = vld [vmem:[#allocation2 + $0x58] sm:$0xff]
    %v81 = vld [vmem:[#allocation2 + $0x60] sm:$0xff]
    %v82 = vld [vmem:[#allocation2 + $0x68] sm:$0xff]
    %v83 = vld [vmem:[#allocation2 + $0x70] sm:$0xff]
    %v84 = vld [vmem:[#allocation2 + $0x78] sm:$0xff]
    %v85 = vld [vmem:[%s2] sm:$0x1]
    %v87 = vlaneseq
    %v88 = vshrl.u32 %v87, 7
    %v89 = vsub.s32 0, %v88
    %v90 = vrot.slane %v85, %v89
    %92 = vmatprep.subr.mxu0 0.0
    %93 = vmatpush1.msra.mxu0 %v69
    %94 = vmatprep.subr.mxu0 0.0
    %95 = vmatpush1.msra.mxu0 %v70
    %96 = vmatprep.subr.mxu0 0.0
    %97 = vmatpush1.msra.mxu0 %v71
    %98 = vmatprep.subr.mxu0 0.0
    %99 = vmatpush1.msra.mxu0 %v72
    %100 = vmatprep.subr.mxu0 0.0
    %101 = vmatpush1.msra.mxu0 %v73
    %102 = vmatprep.subr.mxu0 0.0
    %103 = vmatpush1.msra.mxu0 %v74
    %104 = vmatprep.subr.mxu0 0.0
    %105 = vmatpush1.msra.mxu0 %v75
    %106 = vmatprep.subr.mxu0 0.0
    %107 = vmatpush1.msra.mxu0 %v76
    %108 = vmatprep.subr.mxu0 0.0
    %109 = vmatpush1.msra.mxu0 %v77
    %110 = vmatprep.subr.mxu0 0.0
    %111 = vmatpush1.msra.mxu0 %v78
    %112 = vmatprep.subr.mxu0 0.0
    %113 = vmatpush1.msra.mxu0 %v79
    %114 = vmatprep.subr.mxu0 0.0
    %115 = vmatpush1.msra.mxu0 %v80
    %116 = vmatprep.subr.mxu0 0.0
    %117 = vmatpush1.msra.mxu0 %v81
    %118 = vmatprep.subr.mxu0 0.0
    %119 = vmatpush1.msra.mxu0 %v82
    %120 = vmatprep.subr.mxu0 0.0
    %121 = vmatpush1.msra.mxu0 %v83
    %122 = vmatprep.subr.mxu0 0.0
    %123 = vmatpush1.msra.mxu0 %v84
    %124 = vmatprep.subr.mxu0 0.0
    %125 = vmatpush1.msra.mxu0 0.0
    %126 = vmatprep.subr.mxu0 0.0
    %127 = vmatpush1.msra.mxu0 0.0
    %128 = vmatprep.subr.mxu0 0.0
    %129 = vmatpush1.msra.mxu0 0.0
    %130 = vmatprep.subr.mxu0 0.0
    %131 = vmatpush1.msra.mxu0 0.0
    %132 = vmatprep.subr.mxu0 0.0
    %133 = vmatpush1.msra.mxu0 0.0
    %134 = vmatprep.subr.mxu0 0.0
    %135 = vmatpush1.msra.mxu0 0.0
    %136 = vmatprep.subr.mxu0 0.0
    %137 = vmatpush1.msra.mxu0 0.0
    %138 = vmatprep.subr.mxu0 0.0
    %139 = vmatpush1.msra.mxu0 0.0
    %140 = vmatprep.subr.mxu0 0.0
    %141 = vmatpush1.msra.mxu0 0.0
    %142 = vmatprep.subr.mxu0 0.0
    %143 = vmatpush1.msra.mxu0 0.0
    %144 = vmatprep.subr.mxu0 0.0
    %145 = vmatpush1.msra.mxu0 0.0
    %146 = vmatprep.subr.mxu0 0.0
    %147 = vmatpush1.msra.mxu0 0.0
    %148 = vmatprep.subr.mxu0 0.0
    %149 = vmatpush1.msra.mxu0 0.0
    %150 = vmatprep.subr.mxu0 0.0
    %151 = vmatpush1.msra.mxu0 0.0
    %152 = vmatprep.subr.mxu0 0.0
    %153 = vmatpush1.msra.mxu0 0.0
    %154 = vmatprep.subr.mxu0 0.0
    %155 = vmatpush1.msra.mxu0 0.0
    %156 = vmatprep.mubr.f32.mxu0 0.0
    %157 = vmatmul.mubr.f32.gmra.mrb[0].mxu0 %v68
    %v158 = vpop.f32.mrb[0].mxu0
    %v159 = vadd.f32 %v90, %v158
    %v160 = vpop.f32.mrb[0].mxu0
    %161 = vdwg.mxu0
    %v162 = vsub.f32 0.0, %v159
    %v163 = vmul.f32 %v162, 1.442695
    %v164 = vpow.pop %v163
    %v165 = vadd.f32 %v164, 1.0
    %v166 = vrcp.pop %v165
    %v167 = vmul.f32 1.0, %v166
    %v168 = vld [vmem:[#allocation5] sm:$0xff]
    %v169 = vld [vmem:[#allocation5 + $0x8] sm:$0xff]
    %v170 = vld [vmem:[#allocation5 + $0x10] sm:$0xff]
    %v171 = vld [vmem:[#allocation5 + $0x18] sm:$0xff]
    %v172 = vld [vmem:[#allocation5 + $0x20] sm:$0xff]
    %v173 = vld [vmem:[#allocation5 + $0x28] sm:$0xff]
    %v174 = vld [vmem:[#allocation5 + $0x30] sm:$0xff]
    %v175 = vld [vmem:[#allocation5 + $0x38] sm:$0xff]
    %v176 = vld [vmem:[#allocation5 + $0x40] sm:$0xff]
    %v177 = vld [vmem:[#allocation5 + $0x48] sm:$0xff]
    %v178 = vld [vmem:[#allocation5 + $0x50] sm:$0xff]
    %v179 = vld [vmem:[#allocation5 + $0x58] sm:$0xff]
    %v180 = vld [vmem:[#allocation5 + $0x60] sm:$0xff]
    %v181 = vld [vmem:[#allocation5 + $0x68] sm:$0xff]
    %v182 = vld [vmem:[#allocation5 + $0x70] sm:$0xff]
    %v183 = vld [vmem:[#allocation5 + $0x78] sm:$0xff]
    %v184 = vld [vmem:[%s4] sm:$0x1]
    %v186 = vlaneseq
    %v187 = vshrl.u32 %v186, 7
    %v188 = vsub.s32 0, %v187
    %v189 = vrot.slane %v184, %v188
    %191 = vmatprep.subr.mxu0 0.0
    %192 = vmatpush1.msra.mxu0 %v168
    %193 = vmatprep.subr.mxu0 0.0
    %194 = vmatpush1.msra.mxu0 %v169
    %195 = vmatprep.subr.mxu0 0.0
    %196 = vmatpush1.msra.mxu0 %v170
    %197 = vmatprep.subr.mxu0 0.0
    %198 = vmatpush1.msra.mxu0 %v171
    %199 = vmatprep.subr.mxu0 0.0
    %200 = vmatpush1.msra.mxu0 %v172
    %201 = vmatprep.subr.mxu0 0.0
    %202 = vmatpush1.msra.mxu0 %v173
    %203 = vmatprep.subr.mxu0 0.0
    %204 = vmatpush1.msra.mxu0 %v174
    %205 = vmatprep.subr.mxu0 0.0
    %206 = vmatpush1.msra.mxu0 %v175
    %207 = vmatprep.subr.mxu0 0.0
    %208 = vmatpush1.msra.mxu0 %v176
    %209 = vmatprep.subr.mxu0 0.0
    %210 = vmatpush1.msra.mxu0 %v177
    %211 = vmatprep.subr.mxu0 0.0
    %212 = vmatpush1.msra.mxu0 %v178
    %213 = vmatprep.subr.mxu0 0.0
    %214 = vmatpush1.msra.mxu0 %v179
    %215 = vmatprep.subr.mxu0 0.0
    %216 = vmatpush1.msra.mxu0 %v180
    %217 = vmatprep.subr.mxu0 0.0
    %218 = vmatpush1.msra.mxu0 %v181
    %219 = vmatprep.subr.mxu0 0.0
    %220 = vmatpush1.msra.mxu0 %v182
    %221 = vmatprep.subr.mxu0 0.0
    %222 = vmatpush1.msra.mxu0 %v183
    %223 = vmatprep.subr.mxu0 0.0
    %224 = vmatpush1.msra.mxu0 0.0
    %225 = vmatprep.subr.mxu0 0.0
    %226 = vmatpush1.msra.mxu0 0.0
    %227 = vmatprep.subr.mxu0 0.0
    %228 = vmatpush1.msra.mxu0 0.0
    %229 = vmatprep.subr.mxu0 0.0
    %230 = vmatpush1.msra.mxu0 0.0
    %231 = vmatprep.subr.mxu0 0.0
    %232 = vmatpush1.msra.mxu0 0.0
    %233 = vmatprep.subr.mxu0 0.0
    %234 = vmatpush1.msra.mxu0 0.0
    %235 = vmatprep.subr.mxu0 0.0
    %236 = vmatpush1.msra.mxu0 0.0
    %237 = vmatprep.subr.mxu0 0.0
    %238 = vmatpush1.msra.mxu0 0.0
    %239 = vmatprep.subr.mxu0 0.0
    %240 = vmatpush1.msra.mxu0 0.0
    %241 = vmatprep.subr.mxu0 0.0
    %242 = vmatpush1.msra.mxu0 0.0
    %243 = vmatprep.subr.mxu0 0.0
    %244 = vmatpush1.msra.mxu0 0.0
    %245 = vmatprep.subr.mxu0 0.0
    %246 = vmatpush1.msra.mxu0 0.0
    %247 = vmatprep.subr.mxu0 0.0
    %248 = vmatpush1.msra.mxu0 0.0
    %249 = vmatprep.subr.mxu0 0.0
    %250 = vmatpush1.msra.mxu0 0.0
    %251 = vmatprep.subr.mxu0 0.0
    %252 = vmatpush1.msra.mxu0 0.0
    %253 = vmatprep.subr.mxu0 0.0
    %254 = vmatpush1.msra.mxu0 0.0
    %255 = vmatprep.mubr.f32.mxu0 0.0
    %256 = vmatmul.mubr.f32.gmra.mrb[0].mxu0 %v167
    %v257 = vpop.f32.mrb[0].mxu0
    %v258 = vadd.f32 %v189, %v257
    %v259 = vpop.f32.mrb[0].mxu0
    %260 = vdwg.mxu0
    %v261 = vsub.f32 0.0, %v258
    %v262 = vmul.f32 %v261, 1.442695
    %v263 = vpow.pop %v262
    %v264 = vadd.f32 %v263, 1.0
    %v265 = vrcp.pop %v264
    %v266 = vmul.f32 1.0, %v265
    %v267 = vld [vmem:[#allocation7] sm:$0xff]
    %v268 = vld [vmem:[#allocation7 + $0x8] sm:$0xff]
    %v269 = vld [vmem:[#allocation7 + $0x10] sm:$0xff]
    %v270 = vld [vmem:[#allocation7 + $0x18] sm:$0xff]
    %v271 = vld [vmem:[#allocation7 + $0x20] sm:$0xff]
    %v272 = vld [vmem:[#allocation7 + $0x28] sm:$0xff]
    %v273 = vld [vmem:[#allocation7 + $0x30] sm:$0xff]
    %v274 = vld [vmem:[#allocation7 + $0x38] sm:$0xff]
    %v275 = vld [vmem:[#allocation7 + $0x40] sm:$0xff]
    %v276 = vld [vmem:[#allocation7 + $0x48] sm:$0xff]
    %v277 = vld [vmem:[#allocation7 + $0x50] sm:$0xff]
    %v278 = vld [vmem:[#allocation7 + $0x58] sm:$0xff]
    %v279 = vld [vmem:[#allocation7 + $0x60] sm:$0xff]
    %v280 = vld [vmem:[#allocation7 + $0x68] sm:$0xff]
    %v281 = vld [vmem:[#allocation7 + $0x70] sm:$0xff]
    %v282 = vld [vmem:[#allocation7 + $0x78] sm:$0xff]
    %v283 = vld [vmem:[%s6] sm:$0x1]
    %v285 = vlaneseq
    %v286 = vshrl.u32 %v285, 7
    %v287 = vsub.s32 0, %v286
    %v288 = vrot.slane %v283, %v287
    %290 = vmatprep.subr.mxu0 0.0
    %291 = vmatpush1.msra.mxu0 %v267
    %292 = vmatprep.subr.mxu0 0.0
    %293 = vmatpush1.msra.mxu0 %v268
    %294 = vmatprep.subr.mxu0 0.0
    %295 = vmatpush1.msra.mxu0 %v269
    %296 = vmatprep.subr.mxu0 0.0
    %297 = vmatpush1.msra.mxu0 %v270
    %298 = vmatprep.subr.mxu0 0.0
    %299 = vmatpush1.msra.mxu0 %v271
    %300 = vmatprep.subr.mxu0 0.0
    %301 = vmatpush1.msra.mxu0 %v272
    %302 = vmatprep.subr.mxu0 0.0
    %303 = vmatpush1.msra.mxu0 %v273
    %304 = vmatprep.subr.mxu0 0.0
    %305 = vmatpush1.msra.mxu0 %v274
    %306 = vmatprep.subr.mxu0 0.0
    %307 = vmatpush1.msra.mxu0 %v275
    %308 = vmatprep.subr.mxu0 0.0
    %309 = vmatpush1.msra.mxu0 %v276
    %310 = vmatprep.subr.mxu0 0.0
    %311 = vmatpush1.msra.mxu0 %v277
    %312 = vmatprep.subr.mxu0 0.0
    %313 = vmatpush1.msra.mxu0 %v278
    %314 = vmatprep.subr.mxu0 0.0
    %315 = vmatpush1.msra.mxu0 %v279
    %316 = vmatprep.subr.mxu0 0.0
    %317 = vmatpush1.msra.mxu0 %v280
    %318 = vmatprep.subr.mxu0 0.0
    %319 = vmatpush1.msra.mxu0 %v281
    %320 = vmatprep.subr.mxu0 0.0
    %321 = vmatpush1.msra.mxu0 %v282
    %322 = vmatprep.subr.mxu0 0.0
    %323 = vmatpush1.msra.mxu0 0.0
    %324 = vmatprep.subr.mxu0 0.0
    %325 = vmatpush1.msra.mxu0 0.0
    %326 = vmatprep.subr.mxu0 0.0
    %327 = vmatpush1.msra.mxu0 0.0
    %328 = vmatprep.subr.mxu0 0.0
    %329 = vmatpush1.msra.mxu0 0.0
    %330 = vmatprep.subr.mxu0 0.0
    %331 = vmatpush1.msra.mxu0 0.0
    %332 = vmatprep.subr.mxu0 0.0
    %333 = vmatpush1.msra.mxu0 0.0
    %334 = vmatprep.subr.mxu0 0.0
    %335 = vmatpush1.msra.mxu0 0.0
    %336 = vmatprep.subr.mxu0 0.0
    %337 = vmatpush1.msra.mxu0 0.0
    %338 = vmatprep.subr.mxu0 0.0
    %339 = vmatpush1.msra.mxu0 0.0
    %340 = vmatprep.subr.mxu0 0.0
    %341 = vmatpush1.msra.mxu0 0.0
    %342 = vmatprep.subr.mxu0 0.0
    %343 = vmatpush1.msra.mxu0 0.0
    %344 = vmatprep.subr.mxu0 0.0
    %345 = vmatpush1.msra.mxu0 0.0
    %346 = vmatprep.subr.mxu0 0.0
    %347 = vmatpush1.msra.mxu0 0.0
    %348 = vmatprep.subr.mxu0 0.0
    %349 = vmatpush1.msra.mxu0 0.0
    %350 = vmatprep.subr.mxu0 0.0
    %351 = vmatpush1.msra.mxu0 0.0
    %352 = vmatprep.subr.mxu0 0.0
    %353 = vmatpush1.msra.mxu0 0.0
    %354 = vmatprep.mubr.f32.mxu0 0.0
    %355 = vmatmul.mubr.f32.gmra.mrb[0].mxu0 %v266
    %v356 = vpop.f32.mrb[0].mxu0
    %v357 = vadd.f32 %v288, %v356
    %v358 = vpop.f32.mrb[0].mxu0
    %359 = vdwg.mxu0
    %360 = vst [vmem:[#allocation8] sm:$0xff] %v357
    // Predicated region
    $region42: #{_mlp_forward.1} parent=1 // pred_check
      _
    $region43: #{_mlp_forward.1} parent=1 // pred_check_branch
      %362 = sbr.rel (0) target = $region45
    $region44: #{_mlp_forward.1} parent=1 // pred_region
      %s364 = ssub.s32 128, 128
      %365 = vsyncadd [#allocation4], %s364
      %s367 = sshll.u32 [#allocation8], 4
      %s368 = int_to_ptr.vmem [resolvable:$true] %s367
      %370 = dma.vmem_to_hbm [thread:$0]  %s368, 128, %s7, [#allocation4]
    $region45: #{_mlp_forward.1} parent=1 // pred_fallthru
      _
    // Predicated region
    $region46: #{_mlp_forward.1} parent=1 // pred_check
      _
    $region47: #{_mlp_forward.1} parent=1 // pred_check_branch
      %372 = sbr.rel (0) target = $region49
    $region48: #{_mlp_forward.1} parent=1 // pred_region
      %373 = dma.done [#allocation4], 128
    $region49: #{_mlp_forward.1} parent=1 // pred_fallthru
      _
    %374 = vsyncpa [#allocation3], 1
    %375 = vsyncpa [#allocation6], 1
    %376 = vsyncpa [#allocation4], 1

</llo_original>
